<compile_context>
chip_gen: v7x
topology: tpu7x:2x2x1
jax: 0.10.0
libtpu: 0.0.40
codegen_flags: <defaults>
</compile_context>

<pallas_src>
import math
from functools import partial

import jax
import jax.numpy as jnp
from jax.experimental import pallas as pl
from jax.experimental.pallas import tpu as pltpu


def _round_up(x, m):
    return ((x + m - 1) // m) * m


def _cdiv(a, b):
    return (a + b - 1) // b


def _tpu_generation():
    """Best-effort TPU generation detection; falls back to a conservative config."""
    try:
        kind = jax.devices()[0].device_kind.lower()
    except Exception:
        return "default"
    if "v7" in kind or "7x" in kind:
        return "v7x"
    if "v6" in kind:
        return "v6e"
    if "v5" in kind:
        return "v5e"
    return "default"


# Generation-aware tile defaults.  Arithmetic intensity of this schedule is
# tm*tn/(tm+tn) flops/byte; tile_k only sets the double-buffered x/w footprint, so it is
# the knob that shrinks to pay for larger output tiles.
_TILE_CONFIGS = {
    # ~197 TF/s bf16 vs ~0.82 TB/s HBM -> ~240 flops/byte needed; 512x512 already meets it.
    "v5e": dict(tile_m=512, tile_n=512, tile_k=1024, mxu_gran=128,
                vmem_limit=64 * 1024 * 1024),
    # ~918 TF/s vs ~1.4 TB/s -> ~650 flops/byte; 2048x2048 (AI=1024) is compute-bound,
    # ~40 MiB VMEM incl. double buffers -> fits 128 MiB easily.
    "v6e": dict(tile_m=2048, tile_n=2048, tile_k=512, mxu_gran=256,
                vmem_limit=100 * 1024 * 1024),
    # ~996 TF/s/TC vs ~1.6 TB/s effective per TC -> ~620 flops/byte; 1024x2048 (AI=683)
    # is ~22 MiB incl. double buffers -> fits the 64 MiB per-TC VMEM with headroom.
    "v7x": dict(tile_m=1024, tile_n=2048, tile_k=512, mxu_gran=256,
                vmem_limit=48 * 1024 * 1024),
    "default": dict(tile_m=512, tile_n=512, tile_k=512, mxu_gran=128,
                    vmem_limit=48 * 1024 * 1024),
}


def dense_fc_kernel(x_ref, w_ref, b_ref, o_ref):
    """y[i,j] = sum_k x[i,k] @ w[k,j] + b[j].

    The output block index is constant across the K grid axis, so o_ref is the resident
    f32 accumulator itself (no separate VMEM scratch needed)."""
    k = pl.program_id(2)

    @pl.when(k == 0)
    def _():
        o_ref[...] = jnp.zeros_like(o_ref)

    # MXU matmul of the (tile_m, tile_k) node tile against the (tile_k, tile_n) weight
    # tile, accumulated in f32 directly in the resident output block.
    o_ref[...] += jnp.dot(x_ref[...], w_ref[...], preferred_element_type=jnp.float32)

    @pl.when(k == pl.num_programs(2) - 1)
    def _():
        # Bias added exactly once, in f32, fused with the lane-dense output block.
        o_ref[...] += b_ref[...]


@partial(
    jax.jit,
    static_argnames=("tile_m", "tile_n", "tile_k", "N",
                     "vmem_limit_bytes", "compute_dtype"),
)
def _dense_fc_call(features, w_pad, b_pad, *, tile_m, tile_n, tile_k, N,
                   vmem_limit_bytes, compute_dtype):
    """features: [M, K] f32, w_pad: [Kp, Np] compute_dtype, b_pad: [1, Np] f32."""
    M, K = features.shape
    Kp, Np = w_pad.shape
    Mp = _round_up(M, tile_m)

    # Zero padding is exact for matmul + broadcast bias add; sliced off at the end.
    x = features.astype(compute_dtype)
    if (Mp, Kp) != (M, K):
        x = jnp.pad(x, ((0, Mp - M), (0, Kp - K)))

    grid = (Mp // tile_m, Np // tile_n, Kp // tile_k)
    gm, gn, gk = grid

    in_itemsize = jnp.dtype(compute_dtype).itemsize
    cost = pl.CostEstimate(
        flops=2 * Mp * Kp * Np,
        transcendentals=0,
        # Account for the M/N reload factors of the tiled schedule.
        bytes_accessed=in_itemsize * (gn * Mp * Kp + gm * Kp * Np)
        + 4 * (Mp * Np + gm * gk * Np),
    )

    out = pl.pallas_call(
        dense_fc_kernel,
        out_shape=jax.ShapeDtypeStruct((Mp, Np), jnp.float32),
        grid_spec=pltpu.PrefetchScalarGridSpec(
            num_scalar_prefetch=0,
            grid=grid,
            in_specs=[
                pl.BlockSpec((tile_m, tile_k), lambda i, j, k: (i, k)),  # node tile
                pl.BlockSpec((tile_k, tile_n), lambda i, j, k: (k, j)),  # weight tile
                pl.BlockSpec((1, tile_n), lambda i, j, k: (0, j)),       # bias row tile
            ],
            out_specs=pl.BlockSpec((tile_m, tile_n), lambda i, j, k: (i, j)),
        ),
        compiler_params=pltpu.CompilerParams(
            dimension_semantics=("parallel", "parallel", "arbitrary"),
            vmem_limit_bytes=vmem_limit_bytes,
        ),
        cost_estimate=cost,
    )(x, w_pad, b_pad)

    # Slice only when padding was actually required.
    if (Mp, Np) != (M, N):
        out = out[:M, :N]
    return out


class DenseFullyConnected:
    """JAX/Pallas port of the APPNP DenseFullyConnected layer: y = x @ W + b."""

    def __init__(self, weight, bias, *, compute_dtype=jnp.bfloat16):
        K, N = weight.shape
        assert bias.shape == (N,)
        self.K, self.N = K, N
        self.compute_dtype = compute_dtype

        self.gen = _tpu_generation()
        cfg = _TILE_CONFIGS.get(self.gen, _TILE_CONFIGS["default"])
        self.cfg = cfg

        gran = cfg["mxu_gran"]  # 256 on v6e/v7x (2x256 MXU), 128 on v5e
        self.tile_n = min(cfg["tile_n"], _round_up(N, gran))
        self.tile_k = min(cfg["tile_k"], _round_up(K, gran))
        self.vmem_limit = cfg["vmem_limit"]

        # Hoisted out of the hot path: cast + pad the weight / bias exactly once.
        Kp = _round_up(K, self.tile_k)
        Np = _round_up(N, self.tile_n)
        w = weight.astype(compute_dtype)
        if (Kp, Np) != (K, N):
            w = jnp.pad(w, ((0, Kp - K), (0, Np - N)))
        b2d = bias.astype(jnp.float32).reshape(1, N)
        if Np != N:
            b2d = jnp.pad(b2d, ((0, 0), (0, Np - N)))
        self.w_pad = jax.device_put(w)
        self.b_pad = jax.device_put(b2d)

    def __call__(self, features):
        M = features.shape[0]
        # 128-row granule: multiple of the bf16 16-row sublane packing and feeds the MXU
        # full-height tiles even for small node counts.
        m_gran = 128
        tile_m = min(self.cfg["tile_m"], _round_up(M, m_gran))

        # v7x: two TensorCores are sharded over the "parallel" grid axes — avoid letting
        # the grid collapse to (1, 1, K) when the problem genuinely spans >= 2 tiles.
        if self.gen == "v7x" and _cdiv(M, tile_m) == 1 and _cdiv(self.N, self.tile_n) == 1:
            half = tile_m // 2
            if half >= m_gran and _cdiv(M, half) >= 2:
                tile_m = half

        return _dense_fc_call(
            features, self.w_pad, self.b_pad,
            tile_m=tile_m, tile_n=self.tile_n, tile_k=self.tile_k,
            N=self.N, vmem_limit_bytes=self.vmem_limit,
            compute_dtype=self.compute_dtype,
        )


def dense_fully_connected(features, weight, bias, *, compute_dtype=jnp.bfloat16):
    """One-shot functional convenience wrapper."""
    return DenseFullyConnected(weight, bias, compute_dtype=compute_dtype)(features)


def init_params(key, in_channels, out_channels):
    """Deterministic init matching the torch module's scheme."""
    k_w, k_b = jax.random.split(key)
    # xavier_uniform_: U(-a, a), a = sqrt(6 / (fan_in + fan_out))
    a = math.sqrt(6.0 / (in_channels + out_channels))
    weight = jax.random.uniform(
        k_w, (in_channels, out_channels), jnp.float32, minval=-a, maxval=a
    )
    # uniform(out_channels, bias): U(-stdv, stdv), stdv = 1/sqrt(out_channels)
    stdv = 1.0 / math.sqrt(out_channels)
    bias = jax.random.uniform(
        k_b, (out_channels,), jnp.float32, minval=-stdv, maxval=stdv
    )
    return weight, bias


if __name__ == "__main__":
    key = jax.random.PRNGKey(0)
    k_feat, k_param = jax.random.split(key)

    # Small shapes (non-multiples of tile sizes to exercise the padding path).
    num_nodes, in_channels, out_channels = 20, 48, 72
    features = jax.random.normal(k_feat, (num_nodes, in_channels), jnp.float32)
    weight, bias = init_params(k_param, in_channels, out_channels)

    # f32 reference.
    ref = features @ weight + bias

    # 1) Default bf16-operand / f32-accumulate path (MXU-native on v5e/v6e/v7x).
    layer = DenseFullyConnected(weight, bias)
    out_bf16 = jax.block_until_ready(layer(features))
    assert out_bf16.shape == (num_nodes, out_channels)
    # Tight check against a matching bf16-input / f32-accumulate reference.
    ref_bf16 = (
        jnp.dot(
            features.astype(jnp.bfloat16),
            weight.astype(jnp.bfloat16),
            preferred_element_type=jnp.float32,
        )
        + bias
    )
    assert jnp.allclose(out_bf16, ref_bf16, atol=1e-5, rtol=1e-5)
    # Loose check against the exact f32 reference (bf16 mantissa).
    assert jnp.allclose(out_bf16, ref, atol=3e-2, rtol=3e-2)

    # 2) Full-precision path for exactness.
    layer_f32 = DenseFullyConnected(weight, bias, compute_dtype=jnp.float32)
    out_f32 = jax.block_until_ready(layer_f32(features))
    assert jnp.allclose(out_f32, ref, atol=1e-5, rtol=1e-5)

    print("KERNEL_OK")
</pallas_src>

<mosaic_0001>
module attributes {stable_mosaic.version = 11 : i64} {
  func.func @dense_fc_kernel(%arg0: i32, %arg1: i32, %arg2: i32, %arg3: memref<128x128xbf16, #tpu.memory_space<vmem>>, %arg4: memref<128x128xbf16, #tpu.memory_space<vmem>>, %arg5: memref<1x128xf32, #tpu.memory_space<vmem>>, %arg6: memref<128x128xf32, #tpu.memory_space<vmem>>) attributes {dimension_semantics = [#tpu.dimension_semantics<parallel>, #tpu.dimension_semantics<parallel>, #tpu.dimension_semantics<arbitrary>], iteration_bounds = array<i64: 1, 1, 1>, scalar_prefetch = 0 : i64, scratch_operands = 0 : i64, tpu.core_type = #tpu.core_type<tc>, window_params = [{transform_indices = @transform_0, window_bounds = array<i64: 128, 128>}, {transform_indices = @transform_1, window_bounds = array<i64: 128, 128>}, {transform_indices = @transform_2, window_bounds = array<i64: 1, 128>}, {transform_indices = @transform_3, window_bounds = array<i64: 128, 128>}]} {
    %c0_i32 = arith.constant 0 : i32
    %0 = arith.cmpi eq, %arg2, %c0_i32 : i32
    %1 = arith.extui %0 : i1 to i32
    %c0_i32_0 = arith.constant 0 : i32
    %2 = arith.cmpi ne, %1, %c0_i32_0 : i32
    scf.if %2 {
      %cst_10 = arith.constant 0.000000e+00 : f32
      %12 = vector.broadcast %cst_10 : f32 to vector<128x128xf32>
      %c0_11 = arith.constant 0 : index
      %c0_12 = arith.constant 0 : index
      %13 = vector.load %arg6[%c0_11, %c0_12] : memref<128x128xf32, #tpu.memory_space<vmem>>, vector<128x128xf32>
      tpu.vector_store %arg6[%c0_11, %c0_12], %12 {strides = array<i32>} : memref<128x128xf32, #tpu.memory_space<vmem>>, vector<128x128xf32>,
    } else {
    }
    %c0 = arith.constant 0 : index
    %c0_1 = arith.constant 0 : index
    %3 = vector.load %arg6[%c0, %c0_1] : memref<128x128xf32, #tpu.memory_space<vmem>>, vector<128x128xf32>
    %c0_2 = arith.constant 0 : index
    %c0_3 = arith.constant 0 : index
    %4 = vector.load %arg3[%c0_2, %c0_3] : memref<128x128xbf16, #tpu.memory_space<vmem>>, vector<128x128xbf16>
    %c0_4 = arith.constant 0 : index
    %c0_5 = arith.constant 0 : index
    %5 = vector.load %arg4[%c0_4, %c0_5] : memref<128x128xbf16, #tpu.memory_space<vmem>>, vector<128x128xbf16>
    %cst = arith.constant dense<0.000000e+00> : vector<128x128xf32>
    %6 = tpu.matmul %4, %5, %cst {dimension_numbers = #tpu.dot_dimension_numbers<[1], [0], [0], [1], [0, 0, 1, 1], [], []>} : vector<128x128xbf16>, vector<128x128xbf16>, vector<128x128xf32> -> vector<128x128xf32>
    %7 = arith.addf %3, %6 : vector<128x128xf32>
    %c0_6 = arith.constant 0 : index
    %c0_7 = arith.constant 0 : index
    %8 = vector.load %arg6[%c0_6, %c0_7] : memref<128x128xf32, #tpu.memory_space<vmem>>, vector<128x128xf32>
    tpu.vector_store %arg6[%c0_6, %c0_7], %7 {strides = array<i32>} : memref<128x128xf32, #tpu.memory_space<vmem>>, vector<128x128xf32>,
    %c0_i32_8 = arith.constant 0 : i32
    %9 = arith.cmpi eq, %arg2, %c0_i32_8 : i32
    %10 = arith.extui %9 : i1 to i32
    %c0_i32_9 = arith.constant 0 : i32
    %11 = arith.cmpi ne, %10, %c0_i32_9 : i32
    scf.if %11 {
      %c0_10 = arith.constant 0 : index
      %c0_11 = arith.constant 0 : index
      %12 = vector.load %arg6[%c0_10, %c0_11] : memref<128x128xf32, #tpu.memory_space<vmem>>, vector<128x128xf32>
      %c0_12 = arith.constant 0 : index
      %c0_13 = arith.constant 0 : index
      %13 = vector.load %arg5[%c0_12, %c0_13] : memref<1x128xf32, #tpu.memory_space<vmem>>, vector<1x128xf32>
      %14 = vector.broadcast %13 : vector<1x128xf32> to vector<128x128xf32>
      %15 = arith.addf %12, %14 : vector<128x128xf32>
      %c0_14 = arith.constant 0 : index
      %c0_15 = arith.constant 0 : index
      %16 = vector.load %arg6[%c0_14, %c0_15] : memref<128x128xf32, #tpu.memory_space<vmem>>, vector<128x128xf32>
      tpu.vector_store %arg6[%c0_14, %c0_15], %15 {strides = array<i32>} : memref<128x128xf32, #tpu.memory_space<vmem>>, vector<128x128xf32>,
    } else {
    }
    return
  }
  func.func @transform_0(%arg0: i32, %arg1: i32, %arg2: i32) -> (i32, i32) {
    %c0_i32 = arith.constant 0 : i32
    return %arg0, %arg2 : i32, i32
  }
  func.func @transform_1(%arg0: i32, %arg1: i32, %arg2: i32) -> (i32, i32) {
    %c0_i32 = arith.constant 0 : i32
    return %arg2, %arg1 : i32, i32
  }
  func.func @transform_2(%arg0: i32, %arg1: i32, %arg2: i32) -> (i32, i32) {
    %c0_i32 = arith.constant 0 : i32
    %c0_i32_0 = arith.constant 0 : i32
    return %c0_i32, %arg1 : i32, i32
  }
  func.func @transform_3(%arg0: i32, %arg1: i32, %arg2: i32) -> (i32, i32) {
    %c0_i32 = arith.constant 0 : i32
    return %arg0, %arg1 : i32, i32
  }
}

</mosaic_0001>

<llo_original>
// kernel: _dense_fc_call.1
$region0: #{_dense_fc_call.1}
  #allocation0 [shape = 'u32[]', space=smem, size = 0x4, offset = 0x4, fixed_abs, tag = 'smem constant byte address 0x4 - core index']
  #allocation1 [shape = 'u32[144,128]{1,0:T(1,128)}', space=vmem, size = 0x12000, scoped, tag = 'internal scratch']
  %s0 = inlined_call_operand.vmem [shape: bf16[128,128], index: 0, kind: input, shape index: {}]
  %s1 = inlined_call_operand.vmem [shape: bf16[128,128], index: 1, kind: input, shape index: {}]
  %s2 = inlined_call_operand.vmem [shape: f32[1,128], index: 2, kind: input, shape index: {}]
  %s3 = inlined_call_operand.vmem [shape: f32[128,128], index: 3, kind: output, shape index: {}]
  %s4 = sld [smem:[#allocation0]]
  $region30: #{_dense_fc_call.1} parent=0
    _
  %s6 = ssub.s32 1, %s4
  %s7 = scalar_select 0, %s6, %s4
  // Predicated region
  $region2: #{_dense_fc_call.1} parent=0 // pred_check
    _
  $region3: #{_dense_fc_call.1} parent=0 // pred_check_branch
    %9 = sbr.rel (0) target = $region5
  $region4: #{_dense_fc_call.1} parent=0 // pred_region
    _
  $region5: #{_dense_fc_call.1} parent=0 // pred_fallthru
    _
  // Predicated region
  $region6: #{_dense_fc_call.1} parent=0 // pred_check
    _
  $region7: #{_dense_fc_call.1} parent=0 // pred_check_branch
    %11 = sbr.rel (0) target = $region9
  $region8: #{_dense_fc_call.1} parent=0 // pred_region
    _
  $region9: #{_dense_fc_call.1} parent=0 // pred_fallthru
    _
  // Predicated region
  $region10: #{_dense_fc_call.1} parent=0 // pred_check
    _
  $region11: #{_dense_fc_call.1} parent=0 // pred_check_branch
    %13 = sbr.rel (0) target = $region13
  $region12: #{_dense_fc_call.1} parent=0 // pred_region
    _
  $region13: #{_dense_fc_call.1} parent=0 // pred_fallthru
    _
  %p15 = scmp.eq.s32.totalorder 0, 0
  // Predicated region
  $region14: #{_dense_fc_call.1} parent=0 // pred_check
    %p16 = pneg %p15
  $region15: #{_dense_fc_call.1} parent=0 // pred_check_branch
    %18 = sbr.rel (%p16) target = $region17
  $region16: #{_dense_fc_call.1} parent=0 // pred_region
    %19 = vst [vmem:[%s3] sm:$0xff] 0.0
    %20 = vst [vmem:[%s3 + $0x8] sm:$0xff] 0.0
    %21 = vst [vmem:[%s3 + $0x10] sm:$0xff] 0.0
    %22 = vst [vmem:[%s3 + $0x18] sm:$0xff] 0.0
    %23 = vst [vmem:[%s3 + $0x20] sm:$0xff] 0.0
    %24 = vst [vmem:[%s3 + $0x28] sm:$0xff] 0.0
    %25 = vst [vmem:[%s3 + $0x30] sm:$0xff] 0.0
    %26 = vst [vmem:[%s3 + $0x38] sm:$0xff] 0.0
    %27 = vst [vmem:[%s3 + $0x40] sm:$0xff] 0.0
    %28 = vst [vmem:[%s3 + $0x48] sm:$0xff] 0.0
    %29 = vst [vmem:[%s3 + $0x50] sm:$0xff] 0.0
    %30 = vst [vmem:[%s3 + $0x58] sm:$0xff] 0.0
    %31 = vst [vmem:[%s3 + $0x60] sm:$0xff] 0.0
    %32 = vst [vmem:[%s3 + $0x68] sm:$0xff] 0.0
    %33 = vst [vmem:[%s3 + $0x70] sm:$0xff] 0.0
    %34 = vst [vmem:[%s3 + $0x78] sm:$0xff] 0.0
  $region17: #{_dense_fc_call.1} parent=0 // pred_fallthru
    _
  %v35 = vld [vmem:[%s3] sm:$0xff]
  %v36 = vld [vmem:[%s3 + $0x8] sm:$0xff]
  %v37 = vld [vmem:[%s3 + $0x10] sm:$0xff]
  %v38 = vld [vmem:[%s3 + $0x18] sm:$0xff]
  %v39 = vld [vmem:[%s3 + $0x20] sm:$0xff]
  %v40 = vld [vmem:[%s3 + $0x28] sm:$0xff]
  %v41 = vld [vmem:[%s3 + $0x30] sm:$0xff]
  %v42 = vld [vmem:[%s3 + $0x38] sm:$0xff]
  %v43 = vld [vmem:[%s3 + $0x40] sm:$0xff]
  %v44 = vld [vmem:[%s3 + $0x48] sm:$0xff]
  %v45 = vld [vmem:[%s3 + $0x50] sm:$0xff]
  %v46 = vld [vmem:[%s3 + $0x58] sm:$0xff]
  %v47 = vld [vmem:[%s3 + $0x60] sm:$0xff]
  %v48 = vld [vmem:[%s3 + $0x68] sm:$0xff]
  %v49 = vld [vmem:[%s3 + $0x70] sm:$0xff]
  %v50 = vld [vmem:[%s3 + $0x78] sm:$0xff]
  %v51 = vld [vmem:[%s0] sm:$0xf]
  %v52 = vld [vmem:[%s0 + $0x4] sm:$0xf]
  %v53 = vld [vmem:[%s0 + $0x8] sm:$0xf]
  %v54 = vld [vmem:[%s0 + $0xc] sm:$0xf]
  %v55 = vld [vmem:[%s0 + $0x10] sm:$0xf]
  %v56 = vld [vmem:[%s0 + $0x14] sm:$0xf]
  %v57 = vld [vmem:[%s0 + $0x18] sm:$0xf]
  %v58 = vld [vmem:[%s0 + $0x1c] sm:$0xf]
  %v59 = vld [vmem:[%s0 + $0x20] sm:$0xf]
  %v60 = vld [vmem:[%s0 + $0x24] sm:$0xf]
  %v61 = vld [vmem:[%s0 + $0x28] sm:$0xf]
  %v62 = vld [vmem:[%s0 + $0x2c] sm:$0xf]
  %v63 = vld [vmem:[%s0 + $0x30] sm:$0xf]
  %v64 = vld [vmem:[%s0 + $0x34] sm:$0xf]
  %v65 = vld [vmem:[%s0 + $0x38] sm:$0xf]
  %v66 = vld [vmem:[%s0 + $0x3c] sm:$0xf]
  %v67 = vld [vmem:[%s1] sm:$0xf]
  %v68 = vld [vmem:[%s1 + $0x4] sm:$0xf]
  %v69 = vld [vmem:[%s1 + $0x8] sm:$0xf]
  %v70 = vld [vmem:[%s1 + $0xc] sm:$0xf]
  %v71 = vld [vmem:[%s1 + $0x10] sm:$0xf]
  %v72 = vld [vmem:[%s1 + $0x14] sm:$0xf]
  %v73 = vld [vmem:[%s1 + $0x18] sm:$0xf]
  %v74 = vld [vmem:[%s1 + $0x1c] sm:$0xf]
  %v75 = vld [vmem:[%s1 + $0x20] sm:$0xf]
  %v76 = vld [vmem:[%s1 + $0x24] sm:$0xf]
  %v77 = vld [vmem:[%s1 + $0x28] sm:$0xf]
  %v78 = vld [vmem:[%s1 + $0x2c] sm:$0xf]
  %v79 = vld [vmem:[%s1 + $0x30] sm:$0xf]
  %v80 = vld [vmem:[%s1 + $0x34] sm:$0xf]
  %v81 = vld [vmem:[%s1 + $0x38] sm:$0xf]
  %v82 = vld [vmem:[%s1 + $0x3c] sm:$0xf]
  %v99 = vunpack.c.l.b16 %v51
  %v100 = vunpack.c.l.b16 %v52
  %v101 = vunpack.c.l.b16 %v53
  %v102 = vunpack.c.l.b16 %v54
  %v103 = vunpack.c.l.b16 %v55
  %v104 = vunpack.c.l.b16 %v56
  %v105 = vunpack.c.l.b16 %v57
  %v106 = vunpack.c.l.b16 %v58
  %v107 = vunpack.c.l.b16 %v59
  %v108 = vunpack.c.l.b16 %v60
  %v109 = vunpack.c.l.b16 %v61
  %v110 = vunpack.c.l.b16 %v62
  %v111 = vunpack.c.l.b16 %v63
  %v112 = vunpack.c.l.b16 %v64
  %v113 = vunpack.c.l.b16 %v65
  %v114 = vunpack.c.l.b16 %v66
  %v115 = vpack.c.b16 %v100, %v99
  %v116 = vpack.c.b16 %v102, %v101
  %v117 = vpack.c.b16 %v104, %v103
  %v118 = vpack.c.b16 %v106, %v105
  %v119 = vpack.c.b16 %v108, %v107
  %v120 = vpack.c.b16 %v110, %v109
  %v121 = vpack.c.b16 %v112, %v111
  %v122 = vpack.c.b16 %v114, %v113
  %v147 = vunpack.c.l.b16 %v67
  %v148 = vunpack.c.l.b16 %v68
  %v149 = vunpack.c.l.b16 %v69
  %v150 = vunpack.c.l.b16 %v70
  %v151 = vunpack.c.l.b16 %v71
  %v152 = vunpack.c.l.b16 %v72
  %v153 = vunpack.c.l.b16 %v73
  %v154 = vunpack.c.l.b16 %v74
  %v155 = vunpack.c.l.b16 %v75
  %v156 = vunpack.c.l.b16 %v76
  %v157 = vunpack.c.l.b16 %v77
  %v158 = vunpack.c.l.b16 %v78
  %v159 = vunpack.c.l.b16 %v79
  %v160 = vunpack.c.l.b16 %v80
  %v161 = vunpack.c.l.b16 %v81
  %v162 = vunpack.c.l.b16 %v82
  %v163 = vpack.c.b16 %v148, %v147
  %v164 = vpack.c.b16 %v150, %v149
  %v165 = vpack.c.b16 %v152, %v151
  %v166 = vpack.c.b16 %v154, %v153
  %v167 = vpack.c.b16 %v156, %v155
  %v168 = vpack.c.b16 %v158, %v157
  %v169 = vpack.c.b16 %v160, %v159
  %v170 = vpack.c.b16 %v162, %v161
  %179 = vmatprep.subr.bf16.mxu0 0
  %180 = vmatpush1.bf16.msra.mxu0 %v163
  %181 = vmatprep.subr.bf16.mxu0 0
  %182 = vmatpush1.bf16.msra.mxu0 %v164
  %183 = vmatprep.subr.bf16.mxu0 0
  %184 = vmatpush1.bf16.msra.mxu0 %v165
  %185 = vmatprep.subr.bf16.mxu0 0
  %186 = vmatpush1.bf16.msra.mxu0 %v166
  %187 = vmatprep.subr.bf16.mxu0 0
  %188 = vmatpush1.bf16.msra.mxu0 %v167
  %189 = vmatprep.subr.bf16.mxu0 0
  %190 = vmatpush1.bf16.msra.mxu0 %v168
  %191 = vmatprep.subr.bf16.mxu0 0
  %192 = vmatpush1.bf16.msra.mxu0 %v169
  %193 = vmatprep.subr.bf16.mxu0 0
  %194 = vmatpush1.bf16.msra.mxu0 %v170
  %195 = vmatprep.subr.bf16.mxu0 0
  %196 = vmatpush1.bf16.msra.mxu0 0
  %197 = vmatprep.subr.bf16.mxu0 0
  %198 = vmatpush1.bf16.msra.mxu0 0
  %199 = vmatprep.subr.bf16.mxu0 0
  %200 = vmatpush1.bf16.msra.mxu0 0
  %201 = vmatprep.subr.bf16.mxu0 0
  %202 = vmatpush1.bf16.msra.mxu0 0
  %203 = vmatprep.subr.bf16.mxu0 0
  %204 = vmatpush1.bf16.msra.mxu0 0
  %205 = vmatprep.subr.bf16.mxu0 0
  %206 = vmatpush1.bf16.msra.mxu0 0
  %207 = vmatprep.subr.bf16.mxu0 0
  %208 = vmatpush1.bf16.msra.mxu0 0
  %209 = vmatprep.subr.bf16.mxu0 0
  %210 = vmatpush1.bf16.msra.mxu0 0
  %211 = vmatprep.mubr.bf16.mxu0 0
  %212 = vmatmul.mubr.bf16.gmra.mrb[0].mxu0 %v115
  %v213 = vpop.f32.mrb[0].mxu0
  %v214 = vadd.f32 0.0, %v213
  %v215 = vpop.f32.mrb[0].mxu0
  %v216 = vpop.f32.mrb[0].mxu0
  %v217 = vadd.f32 0.0, %v216
  %v218 = vpop.f32.mrb[0].mxu0
  %219 = vmatprep.mubr.bf16.mxu0 0
  %220 = vmatmul.mubr.bf16.gmra.mrb[0].mxu0 %v116
  %v221 = vpop.f32.mrb[0].mxu0
  %v222 = vadd.f32 0.0, %v221
  %v223 = vpop.f32.mrb[0].mxu0
  %v224 = vpop.f32.mrb[0].mxu0
  %v225 = vadd.f32 0.0, %v224
  %v226 = vpop.f32.mrb[0].mxu0
  %227 = vmatprep.mubr.bf16.mxu0 0
  %228 = vmatmul.mubr.bf16.gmra.mrb[0].mxu0 %v117
  %v229 = vpop.f32.mrb[0].mxu0
  %v230 = vadd.f32 0.0, %v229
  %v231 = vpop.f32.mrb[0].mxu0
  %v232 = vpop.f32.mrb[0].mxu0
  %v233 = vadd.f32 0.0, %v232
  %v234 = vpop.f32.mrb[0].mxu0
  %235 = vmatprep.mubr.bf16.mxu0 0
  %236 = vmatmul.mubr.bf16.gmra.mrb[0].mxu0 %v118
  %v237 = vpop.f32.mrb[0].mxu0
  %v238 = vadd.f32 0.0, %v237
  %v239 = vpop.f32.mrb[0].mxu0
  %v240 = vpop.f32.mrb[0].mxu0
  %v241 = vadd.f32 0.0, %v240
  %v242 = vpop.f32.mrb[0].mxu0
  %243 = vmatprep.mubr.bf16.mxu0 0
  %244 = vmatmul.mubr.bf16.gmra.mrb[0].mxu0 %v119
  %v245 = vpop.f32.mrb[0].mxu0
  %v246 = vadd.f32 0.0, %v245
  %v247 = vpop.f32.mrb[0].mxu0
  %v248 = vpop.f32.mrb[0].mxu0
  %v249 = vadd.f32 0.0, %v248
  %v250 = vpop.f32.mrb[0].mxu0
  %251 = vmatprep.mubr.bf16.mxu0 0
  %252 = vmatmul.mubr.bf16.gmra.mrb[0].mxu0 %v120
  %v253 = vpop.f32.mrb[0].mxu0
  %v254 = vadd.f32 0.0, %v253
  %v255 = vpop.f32.mrb[0].mxu0
  %v256 = vpop.f32.mrb[0].mxu0
  %v257 = vadd.f32 0.0, %v256
  %v258 = vpop.f32.mrb[0].mxu0
  %259 = vmatprep.mubr.bf16.mxu0 0
  %260 = vmatmul.mubr.bf16.gmra.mrb[0].mxu0 %v121
  %v261 = vpop.f32.mrb[0].mxu0
  %v262 = vadd.f32 0.0, %v261
  %v263 = vpop.f32.mrb[0].mxu0
  %v264 = vpop.f32.mrb[0].mxu0
  %v265 = vadd.f32 0.0, %v264
  %v266 = vpop.f32.mrb[0].mxu0
  %267 = vmatprep.mubr.bf16.mxu0 0
  %268 = vmatmul.mubr.bf16.gmra.mrb[0].mxu0 %v122
  %v269 = vpop.f32.mrb[0].mxu0
  %v270 = vadd.f32 0.0, %v269
  %v271 = vpop.f32.mrb[0].mxu0
  %v272 = vpop.f32.mrb[0].mxu0
  %v273 = vadd.f32 0.0, %v272
  %v274 = vpop.f32.mrb[0].mxu0
  %275 = vdwg.mxu0
  %v276 = vadd.f32 %v35, %v214
  %v277 = vadd.f32 %v36, %v217
  %v278 = vadd.f32 %v37, %v222
  %v279 = vadd.f32 %v38, %v225
  %v280 = vadd.f32 %v39, %v230
  %v281 = vadd.f32 %v40, %v233
  %v282 = vadd.f32 %v41, %v238
  %v283 = vadd.f32 %v42, %v241
  %v284 = vadd.f32 %v43, %v246
  %v285 = vadd.f32 %v44, %v249
  %v286 = vadd.f32 %v45, %v254
  %v287 = vadd.f32 %v46, %v257
  %v288 = vadd.f32 %v47, %v262
  %v289 = vadd.f32 %v48, %v265
  %v290 = vadd.f32 %v49, %v270
  %v291 = vadd.f32 %v50, %v273
  %292 = vst [vmem:[%s3] sm:$0xff] %v276
  %293 = vst [vmem:[%s3 + $0x8] sm:$0xff] %v277
  %294 = vst [vmem:[%s3 + $0x10] sm:$0xff] %v278
  %295 = vst [vmem:[%s3 + $0x18] sm:$0xff] %v279
  %296 = vst [vmem:[%s3 + $0x20] sm:$0xff] %v280
  %297 = vst [vmem:[%s3 + $0x28] sm:$0xff] %v281
  %298 = vst [vmem:[%s3 + $0x30] sm:$0xff] %v282
  %299 = vst [vmem:[%s3 + $0x38] sm:$0xff] %v283
  %300 = vst [vmem:[%s3 + $0x40] sm:$0xff] %v284
  %301 = vst [vmem:[%s3 + $0x48] sm:$0xff] %v285
  %302 = vst [vmem:[%s3 + $0x50] sm:$0xff] %v286
  %303 = vst [vmem:[%s3 + $0x58] sm:$0xff] %v287
  %304 = vst [vmem:[%s3 + $0x60] sm:$0xff] %v288
  %305 = vst [vmem:[%s3 + $0x68] sm:$0xff] %v289
  %306 = vst [vmem:[%s3 + $0x70] sm:$0xff] %v290
  %307 = vst [vmem:[%s3 + $0x78] sm:$0xff] %v291
  // Predicated region
  $region18: #{_dense_fc_call.1} parent=0 // pred_check
    %p308 = pneg %p15
  $region19: #{_dense_fc_call.1} parent=0 // pred_check_branch
    %310 = sbr.rel (%p308) target = $region21
  $region20: #{_dense_fc_call.1} parent=0 // pred_region
    %v311 = vld [vmem:[%s3] sm:$0xff]
    %v312 = vld [vmem:[%s3 + $0x8] sm:$0xff]
    %v313 = vld [vmem:[%s3 + $0x10] sm:$0xff]
    %v314 = vld [vmem:[%s3 + $0x18] sm:$0xff]
    %v315 = vld [vmem:[%s3 + $0x20] sm:$0xff]
    %v316 = vld [vmem:[%s3 + $0x28] sm:$0xff]
    %v317 = vld [vmem:[%s3 + $0x30] sm:$0xff]
    %v318 = vld [vmem:[%s3 + $0x38] sm:$0xff]
    %v319 = vld [vmem:[%s3 + $0x40] sm:$0xff]
    %v320 = vld [vmem:[%s3 + $0x48] sm:$0xff]
    %v321 = vld [vmem:[%s3 + $0x50] sm:$0xff]
    %v322 = vld [vmem:[%s3 + $0x58] sm:$0xff]
    %v323 = vld [vmem:[%s3 + $0x60] sm:$0xff]
    %v324 = vld [vmem:[%s3 + $0x68] sm:$0xff]
    %v325 = vld [vmem:[%s3 + $0x70] sm:$0xff]
    %v326 = vld [vmem:[%s3 + $0x78] sm:$0xff]
    %v327 = vld [vmem:[%s2] sm:$0x1]
    %v329 = vlaneseq
    %v330 = vshrl.u32 %v329, 7
    %v331 = vsub.s32 0, %v330
    %v332 = vrot.slane %v327, %v331
    %v334 = vadd.f32 %v311, %v332
    %v335 = vadd.f32 %v312, %v332
    %v336 = vadd.f32 %v313, %v332
    %v337 = vadd.f32 %v314, %v332
    %v338 = vadd.f32 %v315, %v332
    %v339 = vadd.f32 %v316, %v332
    %v340 = vadd.f32 %v317, %v332
    %v341 = vadd.f32 %v318, %v332
    %v342 = vadd.f32 %v319, %v332
    %v343 = vadd.f32 %v320, %v332
    %v344 = vadd.f32 %v321, %v332
    %v345 = vadd.f32 %v322, %v332
    %v346 = vadd.f32 %v323, %v332
    %v347 = vadd.f32 %v324, %v332
    %v348 = vadd.f32 %v325, %v332
    %v349 = vadd.f32 %v326, %v332
    %350 = vst [vmem:[%s3] sm:$0xff] %v334
    %351 = vst [vmem:[%s3 + $0x8] sm:$0xff] %v335
    %352 = vst [vmem:[%s3 + $0x10] sm:$0xff] %v336
    %353 = vst [vmem:[%s3 + $0x18] sm:$0xff] %v337
    %354 = vst [vmem:[%s3 + $0x20] sm:$0xff] %v338
    %355 = vst [vmem:[%s3 + $0x28] sm:$0xff] %v339
    %356 = vst [vmem:[%s3 + $0x30] sm:$0xff] %v340
    %357 = vst [vmem:[%s3 + $0x38] sm:$0xff] %v341
    %358 = vst [vmem:[%s3 + $0x40] sm:$0xff] %v342
    %359 = vst [vmem:[%s3 + $0x48] sm:$0xff] %v343
    %360 = vst [vmem:[%s3 + $0x50] sm:$0xff] %v344
    %361 = vst [vmem:[%s3 + $0x58] sm:$0xff] %v345
    %362 = vst [vmem:[%s3 + $0x60] sm:$0xff] %v346
    %363 = vst [vmem:[%s3 + $0x68] sm:$0xff] %v347
    %364 = vst [vmem:[%s3 + $0x70] sm:$0xff] %v348
    %365 = vst [vmem:[%s3 + $0x78] sm:$0xff] %v349
  $region21: #{_dense_fc_call.1} parent=0 // pred_fallthru
    _
  // Predicated region
  $region22: #{_dense_fc_call.1} parent=0 // pred_check
    _
  $region23: #{_dense_fc_call.1} parent=0 // pred_check_branch
    %367 = sbr.rel (0) target = $region25
  $region24: #{_dense_fc_call.1} parent=0 // pred_region
    _
  $region25: #{_dense_fc_call.1} parent=0 // pred_fallthru
    _
  // Predicated region
  $region26: #{_dense_fc_call.1} parent=0 // pred_check
    _
  $region27: #{_dense_fc_call.1} parent=0 // pred_check_branch
    %369 = sbr.rel (0) target = $region29
  $region28: #{_dense_fc_call.1} parent=0 // pred_region
    _
  $region29: #{_dense_fc_call.1} parent=0 // pred_fallthru
    _

</llo_original>
